<compile_context>
chip_gen: v7x
topology: tpu7x:2x2x1
jax: 0.10.0
libtpu: 0.0.40
codegen_flags: <defaults>
</compile_context>

<pallas_src>
import functools

import numpy as np

import jax
import jax.numpy as jnp
from jax.experimental import pallas as pl
from jax.experimental.pallas import tpu as pltpu


def _silu(z):
    # z * sigmoid(z); the reciprocal goes to the (otherwise idle) EUP slot.
    return z * pl.reciprocal(1.0 + jnp.exp(-z), approx=True)


# ---------------------------------------------------------------------------
# Host-side helpers: pooling plan (static shifts) + 0/-inf border bias planes.
# ---------------------------------------------------------------------------

@functools.lru_cache(maxsize=1)
def _roll_matches_jnp():
    """One-time probe: does pltpu.roll follow jnp.roll's shift convention?"""
    def probe(x_ref, o_ref):
        o_ref[...] = pltpu.roll(x_ref[...], shift=1, axis=1)

    x = jnp.arange(8 * 128, dtype=jnp.float32).reshape(8, 128)
    y = pl.pallas_call(
        probe, out_shape=jax.ShapeDtypeStruct((8, 128), jnp.float32))(x)
    y = np.asarray(jax.block_until_ready(y))
    xn = np.asarray(x)
    if np.array_equal(y, np.roll(xn, 1, axis=1)):
        return True
    if np.array_equal(y, np.roll(xn, -1, axis=1)):
        return False
    raise RuntimeError("unexpected pltpu.roll semantics")


def _build_pool_plan(H, W, HW_pad, ks, roll_like_jnp):
    """For each pool k: (w_steps, h_steps); each step = (roll_shift, bias_row).

    sign=+1 means "neighbour s positions towards smaller w (resp. h)", i.e. the
    source lane is i - s (resp. i - s*W); sign=-1 is towards larger w/h.
    `roll_like_jnp` selects the pltpu.roll shift realizing that source.
    """
    row_of, rows, plan = {}, [], []

    def row(axis, s, sign):
        key = (axis, s, sign)
        if key not in row_of:
            row_of[key] = len(rows)
            rows.append(key)
        return row_of[key]

    def shift_for(delta):          # want source lane = (i - delta) % HW_pad
        return delta % HW_pad if roll_like_jnp else (-delta) % HW_pad

    for k in ks:
        p = k // 2
        w_steps = []
        for s in range(1, min(p, W - 1) + 1):
            w_steps.append((shift_for(+s), row('w', s, +1)))
            w_steps.append((shift_for(-s), row('w', s, -1)))
        h_steps = []
        for s in range(1, min(p, H - 1) + 1):
            h_steps.append((shift_for(+s * W), row('h', s, +1)))
            h_steps.append((shift_for(-s * W), row('h', s, -1)))
        plan.append((tuple(w_steps), tuple(h_steps)))
    return tuple(plan), tuple(rows)


def _build_bias_planes(rows, H, W, HW_pad):
    """(n_rows, HW_pad) f32: 0 where the shifted neighbour is a valid in-image
    neighbour, -inf otherwise (== nn.MaxPool2d's -inf padding).  Pad lanes are
    left at 0: validity is derived from the live geometry only, so live lanes
    never read from pad lanes."""
    hw = H * W
    h_idx = np.arange(hw) // W
    w_idx = np.arange(hw) % W
    planes = np.zeros((len(rows), HW_pad), np.float32)
    for r, (axis, s, sign) in enumerate(rows):
        idx = w_idx if axis == 'w' else h_idx
        lim = W if axis == 'w' else H
        valid = (idx - s >= 0) if sign > 0 else (idx + s <= lim - 1)
        planes[r, :hw] = np.where(valid, 0.0, -np.inf).astype(np.float32)
    return jnp.asarray(planes)


# ---------------------------------------------------------------------------
# Kernel
# ---------------------------------------------------------------------------

def spp_kernel(x_ref, bias_ref, w1_ref, b1_ref, w2_ref, b2_ref, o_ref, acc_ref,
               *, plan, mxu_dtype):
    c = pl.program_id(1)

    @pl.when(c == 0)
    def _init():
        acc_ref[...] = jnp.zeros_like(acc_ref)

    # cv1 (fused conv+BN) + SiLU on this channel block, f32 accumulation.
    a = jnp.dot(w1_ref[...], x_ref[...].astype(mxu_dtype),
                preferred_element_type=jnp.float32) + b1_ref[...]
    a = _silu(a)

    def accumulate(i, plane):
        acc_ref[...] += jnp.dot(w2_ref[i], plane.astype(mxu_dtype),
                                preferred_element_type=jnp.float32)

    def maxpool(z, steps_w, steps_h):
        # Separable stride-1 max pool; -inf borders come from precomputed planes.
        out = z
        for shift, row in steps_w:                 # 1-D max along W
            zr = pltpu.roll(z, shift=shift, axis=1)
            out = jnp.maximum(out, zr + bias_ref[pl.ds(row, 1), :])
        zrow = out
        out = zrow
        for shift, row in steps_h:                 # 1-D max along H
            zr = pltpu.roll(zrow, shift=shift, axis=1)
            out = jnp.maximum(out, zr + bias_ref[pl.ds(row, 1), :])
        return out

    # cv2 accumulation interleaved with the (chained) pooling so MXU work
    # overlaps the XLU/VPU pooling; only two activation planes stay live.
    accumulate(0, a)
    z = a
    for i, (steps_w, steps_h) in enumerate(plan):
        z = maxpool(z, steps_w, steps_h)
        accumulate(i + 1, z)

    @pl.when(c == pl.num_programs(1) - 1)
    def _finalize():
        o_ref[...] = _silu(acc_ref[...] + b2_ref[...]).astype(o_ref.dtype)


# ---------------------------------------------------------------------------
# Wrapper
# ---------------------------------------------------------------------------

def spp_forward(x, w1_eff, b1_eff, w2_eff, b2_eff, ks=(5, 9, 13), *,
                c_block=None, mxu_dtype=jnp.bfloat16):
    """x: (B, C1, H, W) f32.  w1_eff: (C_, C1), b1_eff: (C_,),
    w2_eff: (C2, 4*C_), b2_eff: (C2,)  -- conv+BN already fused offline."""
    B, C1, H, W = x.shape
    C_ = w1_eff.shape[0]
    C2 = w2_eff.shape[0]
    HW = H * W
    HW_pad = max(128, ((HW + 127) // 128) * 128)        # lane-dense stores
    out_dtype = x.dtype
    if c_block is None:
        c_block = C_ if C_ <= 256 else 128               # bound per-step VMEM
    assert C_ % c_block == 0, "c_block must divide C_"
    n_cblk = C_ // c_block

    x_flat = x.reshape(B, C1, HW)
    if HW_pad != HW:
        x_flat = jnp.pad(x_flat, ((0, 0), (0, 0), (0, HW_pad - HW)))
    x_flat = x_flat.astype(mxu_dtype)                    # halves HBM traffic for x

    plan, rows = _build_pool_plan(H, W, HW_pad, tuple(ks), _roll_matches_jnp())
    bias_planes = _build_bias_planes(rows, H, W, HW_pad)
    n_rows = bias_planes.shape[0]

    w1 = w1_eff.astype(mxu_dtype)
    b1 = b1_eff.reshape(C_, 1).astype(jnp.float32)
    # cv2's fused weight split into the 4 blocks matching [a, y1, y2, y3].
    w2_blocks = jnp.stack([w2_eff[:, i * C_:(i + 1) * C_] for i in range(4)],
                          axis=0).astype(mxu_dtype)
    b2 = b2_eff.reshape(C2, 1).astype(jnp.float32)

    kern = functools.partial(spp_kernel, plan=plan, mxu_dtype=mxu_dtype)

    # Working-set estimate for an explicit VMEM limit (tile-padded, with headroom).
    def _tile_bytes(r, cdim, item):
        return (-(-r // 8) * 8) * (-(-cdim // 128) * 128) * item
    mxu_b = jnp.dtype(mxu_dtype).itemsize
    est = (2 * _tile_bytes(C1, HW_pad, mxu_b)            # x block (double-buffered)
           + _tile_bytes(n_rows, HW_pad, 4)              # bias planes
           + 2 * _tile_bytes(c_block, C1, mxu_b)         # w1
           + 2 * _tile_bytes(c_block, 1, 4)              # b1
           + 2 * 4 * _tile_bytes(C2, c_block, mxu_b)     # w2 blocks
           + _tile_bytes(C2, 1, 4)                       # b2
           + 2 * _tile_bytes(C2, HW_pad, jnp.dtype(out_dtype).itemsize)  # out
           + _tile_bytes(C2, HW_pad, 4)                  # f32 accumulator scratch
           + 8 * _tile_bytes(c_block, HW_pad, 4))        # a / pooled plane / temps
    vmem_limit = int(min(128 * 2**20, max(32 * 2**20, 2 * est)))

    out_shape = jax.ShapeDtypeStruct((B, C2, HW_pad), out_dtype)
    grid = (B, n_cblk)

    def _run(single_buffer_invariants):
        def spec(shape, imap, invariant=False):
            if invariant and single_buffer_invariants:
                return pl.BlockSpec(shape, imap, pipeline_mode=pl.Buffered(1))
            return pl.BlockSpec(shape, imap)

        wgt_inv = (n_cblk == 1)   # weights are grid-invariant iff one channel block
        in_specs = [
            spec((None, C1, HW_pad), lambda b, c: (b, 0, 0)),
            spec((n_rows, HW_pad), lambda b, c: (0, 0), invariant=True),
            spec((c_block, C1), lambda b, c: (c, 0), invariant=wgt_inv),
            spec((c_block, 1), lambda b, c: (c, 0), invariant=wgt_inv),
            spec((4, C2, c_block), lambda b, c: (0, 0, c), invariant=wgt_inv),
            spec((C2, 1), lambda b, c: (0, 0), invariant=True),
        ]
        out_specs = pl.BlockSpec((None, C2, HW_pad), lambda b, c: (b, 0, 0))
        fn = pl.pallas_call(
            kern,
            out_shape=out_shape,
            grid=grid,
            in_specs=in_specs,
            out_specs=out_specs,
            scratch_shapes=[pltpu.VMEM((C2, HW_pad), jnp.float32)],
            compiler_params=pltpu.CompilerParams(
                dimension_semantics=("parallel", "arbitrary"),
                vmem_limit_bytes=vmem_limit),
        )
        return fn(x_flat, bias_planes, w1, b1, w2_blocks, b2)

    try:
        out = jax.block_until_ready(_run(True))
    except Exception:
        # pl.Buffered(1) not supported on this jax/libtpu -> default buffering.
        out = jax.block_until_ready(_run(False))

    return out[:, :, :HW].reshape(B, C2, H, W)


# ---------------------------------------------------------------------------
# Offline conv+BN fusion and pure-JAX reference (mirrors the PyTorch module).
# ---------------------------------------------------------------------------

def fuse_conv_bn(conv_w, gamma, beta, mean, var, eps=1e-5):
    """Fold BatchNorm into a bias-free 1x1 conv: returns (w_eff, b_eff)."""
    scale = gamma / jnp.sqrt(var + eps)
    return conv_w * scale[:, None], beta - mean * scale


def reference_spp(x, conv1_w, bn1, conv2_w, bn2, ks=(5, 9, 13), eps=1e-5):
    """Pure-JAX reference faithful to the PyTorch SPP forward (chained pools)."""
    def conv_bn_silu(z, w, bn):
        gamma, beta, mean, var = bn
        y = jnp.einsum('oc,bchw->bohw', w, z, precision=jax.lax.Precision.HIGHEST)
        y = (y - mean[None, :, None, None]) / jnp.sqrt(var[None, :, None, None] + eps)
        y = y * gamma[None, :, None, None] + beta[None, :, None, None]
        return y * jax.nn.sigmoid(y)

    def maxpool(z, k):                      # stride 1, -inf padding (nn.MaxPool2d)
        p = k // 2
        return jax.lax.reduce_window(
            z, -jnp.inf, jax.lax.max, (1, 1, k, k), (1, 1, 1, 1),
            [(0, 0), (0, 0), (p, p), (p, p)])

    a = conv_bn_silu(x, conv1_w, bn1)
    y1 = maxpool(a, ks[0])
    y2 = maxpool(y1, ks[1])                 # chained, exactly as the module
    y3 = maxpool(y2, ks[2])
    cat = jnp.concatenate([a, y1, y2, y3], axis=1)
    return conv_bn_silu(cat, conv2_w, bn2)


if __name__ == "__main__":
    def make_params(key, C1, C2):
        C_ = C1 // 2
        k = jax.random.split(key, 10)
        conv1_w = 0.5 * jax.random.normal(k[0], (C_, C1), jnp.float32)
        bn1 = (1.0 + 0.1 * jax.random.normal(k[1], (C_,), jnp.float32),   # gamma
               0.1 * jax.random.normal(k[2], (C_,), jnp.float32),         # beta
               0.1 * jax.random.normal(k[3], (C_,), jnp.float32),         # mean
               jax.random.uniform(k[4], (C_,), jnp.float32, 0.5, 1.5))    # var
        conv2_w = 0.3 * jax.random.normal(k[5], (C2, 4 * C_), jnp.float32)
        bn2 = (1.0 + 0.1 * jax.random.normal(k[6], (C2,), jnp.float32),
               0.1 * jax.random.normal(k[7], (C2,), jnp.float32),
               0.1 * jax.random.normal(k[8], (C2,), jnp.float32),
               jax.random.uniform(k[9], (C2,), jnp.float32, 0.5, 1.5))
        return conv1_w, bn1, conv2_w, bn2

    key = jax.random.PRNGKey(0)
    ks = (5, 9, 13)
    # (B, C1, H, W, C2): second case exercises H*W padding to a lane multiple.
    cases = [(2, 4, 16, 16, 8), (1, 6, 10, 10, 5)]
    for i, (B, C1, H, W, C2) in enumerate(cases):
        kx, kp, key = jax.random.split(key, 3)
        x = jax.random.normal(kx, (B, C1, H, W), jnp.float32)
        conv1_w, bn1, conv2_w, bn2 = make_params(kp, C1, C2)

        # Offline conv+BN fusion (exact algebra) -> what the kernel consumes.
        w1_eff, b1_eff = fuse_conv_bn(conv1_w, *bn1)
        w2_eff, b2_eff = fuse_conv_bn(conv2_w, *bn2)

        out = spp_forward(x, w1_eff, b1_eff, w2_eff, b2_eff, ks)
        out = jax.block_until_ready(out)

        ref = reference_spp(x, conv1_w, bn1, conv2_w, bn2, ks)
        assert out.shape == ref.shape == (B, C2, H, W)
        err = float(jnp.max(jnp.abs(out - ref)))
        # Tolerance sized for bf16 MXU operands (weights / matmul inputs are bf16,
        # everything else f32); mxu_dtype=jnp.float32 matches to f32 rounding.
        assert err < 3e-2, f"case {i}: mismatch vs reference (max abs err {err:.3e})"

    print("KERNEL_OK")
</pallas_src>

<mosaic_0001>
module attributes {stable_mosaic.version = 11 : i64} {
  func.func @probe(%arg0: memref<8x128xf32, #tpu.memory_space<vmem>>, %arg1: memref<8x128xf32, #tpu.memory_space<vmem>>) attributes {dimension_semantics = [], scalar_prefetch = 0 : i64, scratch_operands = 0 : i64, tpu.core_type = #tpu.core_type<tc>} {
    %c0 = arith.constant 0 : index
    %c0_0 = arith.constant 0 : index
    %0 = vector.load %arg0[%c0, %c0_0] : memref<8x128xf32, #tpu.memory_space<vmem>>, vector<8x128xf32>
    %c1_i32 = arith.constant 1 : i32
    %1 = tpu.dynamic_rotate %0 by %c1_i32 dim 1 : vector<8x128xf32>, i32 -> vector<8x128xf32>
    %c0_1 = arith.constant 0 : index
    %c0_2 = arith.constant 0 : index
    %2 = vector.load %arg1[%c0_1, %c0_2] : memref<8x128xf32, #tpu.memory_space<vmem>>, vector<8x128xf32>
    tpu.vector_store %arg1[%c0_1, %c0_2], %1 {strides = array<i32>} : memref<8x128xf32, #tpu.memory_space<vmem>>, vector<8x128xf32>,
    return
  }
}

</mosaic_0001>

<llo_original>
// kernel: tpu_custom_call.1
$region0: #{tpu_custom_call.1}
  #allocation0 [shape = 'u32[]', space=smem, size = 0x4, offset = 0x4, fixed_abs, tag = 'smem constant byte address 0x4 - core index']
  #allocation1 [shape = 'u32[144,128]{1,0:T(1,128)}', space=vmem, size = 0x12000, scoped, tag = 'internal scratch']
  %s0 = inlined_call_operand.hbm [shape: f32[8,128], index: 0, kind: input, shape index: {}]
  %s1 = inlined_call_operand.hbm [shape: f32[8,128], index: 1, kind: output, shape index: {}]
  %s2 = sld [smem:[#allocation0]]
  $region18: #{tpu_custom_call.1} parent=0
    _
  %s4 = ssub.s32 1, %s2
  %s5 = scalar_select 0, %s4, %s2
  $region1: #{tpu_custom_call.1} parent=0
    #allocation2 [shape = 'u8[4096]{0}', space=vmem, size = 0x1000, scoped, tag = 'input window, operand 0, single buffered']
    #allocation3 [shape = 's32[1]{0}', space=sflag, size = 0x4, scoped, tag = 'scoped memory for tpu_custom_call.1']
    #allocation4 [shape = 's32[1]{0}', space=sflag, size = 0x4, scoped, tag = 'scoped memory for tpu_custom_call.1']
    #allocation5 [shape = 'u8[4096]{0}', space=vmem, size = 0x1000, scoped, tag = 'output window, operand 0, single buffered']
    %6 = vsyncpa [#allocation3], 0
    %7 = vsyncpa [#allocation4], 0
    // Predicated region
    $region2: #{tpu_custom_call.1} parent=1 // pred_check
      _
    $region3: #{tpu_custom_call.1} parent=1 // pred_check_branch
      %9 = sbr.rel (0) target = $region5
    $region4: #{tpu_custom_call.1} parent=1 // pred_region
      %s11 = ssub.s32 128, 128
      %12 = vsyncadd [#allocation3], %s11
      %s14 = sshll.u32 [#allocation2], 4
      %s15 = int_to_ptr.vmem [resolvable:$true] %s14
      %17 = dma.hbm_to_vmem [thread:$0]  %s0, 128, %s15, [#allocation3]
    $region5: #{tpu_custom_call.1} parent=1 // pred_fallthru
      _
    // Predicated region
    $region6: #{tpu_custom_call.1} parent=1 // pred_check
      _
    $region7: #{tpu_custom_call.1} parent=1 // pred_check_branch
      %19 = sbr.rel (0) target = $region9
    $region8: #{tpu_custom_call.1} parent=1 // pred_region
      %20 = dma.done [#allocation3], 128
    $region9: #{tpu_custom_call.1} parent=1 // pred_fallthru
      _
    %v21 = vld [vmem:[#allocation2] sm:$0xff]
    %22 = vrot.lane.b32.xlu0 %v21, 1
    %v23 = vpop.permute.xlu0 %22
    %24 = vst [vmem:[#allocation5] sm:$0xff] %v23
    // Predicated region
    $region10: #{tpu_custom_call.1} parent=1 // pred_check
      _
    $region11: #{tpu_custom_call.1} parent=1 // pred_check_branch
      %26 = sbr.rel (0) target = $region13
    $region12: #{tpu_custom_call.1} parent=1 // pred_region
      %s28 = ssub.s32 128, 128
      %29 = vsyncadd [#allocation4], %s28
      %s31 = sshll.u32 [#allocation5], 4
      %s32 = int_to_ptr.vmem [resolvable:$true] %s31
      %34 = dma.vmem_to_hbm [thread:$0]  %s32, 128, %s1, [#allocation4]
    $region13: #{tpu_custom_call.1} parent=1 // pred_fallthru
      _
    // Predicated region
    $region14: #{tpu_custom_call.1} parent=1 // pred_check
      _
    $region15: #{tpu_custom_call.1} parent=1 // pred_check_branch
      %36 = sbr.rel (0) target = $region17
    $region16: #{tpu_custom_call.1} parent=1 // pred_region
      %37 = dma.done [#allocation4], 128
    $region17: #{tpu_custom_call.1} parent=1 // pred_fallthru
      _
    %38 = vsyncpa [#allocation3], 1
    %39 = vsyncpa [#allocation4], 1

</llo_original>
